<compile_context>
chip_gen: v5e
topology: v5e:2x2
jax: 0.10.0
libtpu: 0.0.40
codegen_flags: <defaults>
</compile_context>

<pallas_src>
import functools

import jax
import jax.numpy as jnp
from jax.experimental import pallas as pl
from jax.experimental.pallas import tpu as pltpu


def _sds_tile_kernel(coef_ref, wcfg_ref, c_ref, xT_ref, wencT_ref, epsT_ref,
                     o_ref, *, n_lat, batch):
    b = pl.program_id(0)

    # --- prepare_latents (transposed, constants pre-folded) -----------------
    #   z^T = sf*((2x-1) @ w_enc)^T = (2*sf*w_enc^T) @ x^T - sf*colsum(w_enc)
    # TODO(synk): real pipe.vae.encode(x).latent_dist.sample() replaced by a
    # deterministic patchified linear projection (distribution mean, no sample).
    mm = jnp.dot(wencT_ref[...], xT_ref[...],
                 preferred_element_type=jnp.float32)          # (N, TM) f32
    z = mm - c_ref[...]                                       # (N, TM) f32

    eps = epsT_ref[...].astype(jnp.float32)                   # (N, TM) f32

    # --- per-batch DDPM / grad-weight scalars from SMEM ---------------------
    sa = coef_ref[b]                   # sqrt(alphas_cumprod[t_b])
    ss = coef_ref[batch + b]           # sqrt(1 - alphas_cumprod[t_b])
    gw = coef_ref[2 * batch + b]       # grad_scale * (1 - alphas_cumprod[t_b])

    # --- scheduler.add_noise -------------------------------------------------
    zt = sa * z + ss * eps                                     # (N, TM) f32

    # --- UNet stand-in (CFG pre-folded) as VPU broadcast-FMA chains ---------
    # TODO(synk): real text-conditioned UNet(z_in, t, text_embeddings) replaced
    # by a deterministic channel-mixing matrix (uncond/cond already combined).
    # grad_i = gw * (sum_j wcfg[i,j]*zt_j - eps_i);   partial = sum_i grad_i^2
    gsq = jnp.zeros((1, zt.shape[1]), jnp.float32)
    for i in range(n_lat):
        e_i = wcfg_ref[i * n_lat] * zt[0:1, :]
        for j in range(1, n_lat):
            e_i = e_i + wcfg_ref[i * n_lat + j] * zt[j:j + 1, :]
        g_i = gw * (e_i - eps[i:i + 1, :])
        # Reference: torch.nan_to_num(grads, 0.0, 0.0, 0.0); folding grad_scale
        # into gw before the nan_to_num is equivalent for the 0/0/0 mapping.
        g_i = jnp.nan_to_num(g_i, nan=0.0, posinf=0.0, neginf=0.0)
        gsq = gsq + g_i * g_i

    # Lane-dense per-tile partial of sum(grad^2); cross-tile reduce in wrapper.
    o_ref[...] = gsq[None, :, :]


def sds_video_loss(x_aug, w_enc, w_unc, w_cond, eps,
                   sqrt_alpha, sqrt_sigma, grad_w,
                   *, patch, scaling_factor=0.18215, guidance_scale=7.5,
                   grad_scale=1.0, tile_m=None):
    B, F, C, H, W = x_aug.shape
    p = patch
    h, w = H // p, W // p
    M = F * h * w                     # latent "pixels" (patches) per batch elem
    BM = B * M
    K = C * p * p                     # patch feature size
    N = w_enc.shape[1]                # latent channels

    if tile_m is None:
        tile_m = 128
        while tile_m * 2 <= min(M, 2048) and M % (tile_m * 2) == 0:
            tile_m *= 2
    assert tile_m % 128 == 0 and M % tile_m == 0, (M, tile_m)
    assert K % 16 == 0, "pad K to a multiple of 16 for bf16 sublane packing"
    n_m = M // tile_m
    n_tiles = B * n_m

    # Patchify straight into the transposed bf16 layout the kernel wants:
    # (K, B*M) with K ordered (C, p, p) and columns ordered (B, F, h, w).
    # TODO(synk): fuse this patchify into the kernel via strided make_async_copy
    # from x_aug held at memory_space=pl.ANY to remove this extra HBM pass.
    xT = (x_aug.reshape(B, F, C, h, p, w, p)
               .transpose(2, 4, 6, 0, 1, 3, 5)
               .reshape(K, BM)).astype(jnp.bfloat16)

    # eps in the same transposed (N, B*M) layout, bf16 for DMA.
    epsT = eps.transpose(2, 0, 1).reshape(N, BM).astype(jnp.bfloat16)

    # Fold constants into operands: 2*sf into the encode weight, sf into the
    # affine bias (column sums fold the x*2-1), grad_scale into the weight row.
    wencT = (2.0 * scaling_factor * w_enc.T).astype(jnp.bfloat16)       # (N, K)
    c = (scaling_factor * w_enc.sum(axis=0)).reshape(N, 1).astype(jnp.float32)

    # Classifier-free guidance folded into one NxN mix (stand-in is linear).
    wcfg = (w_unc + guidance_scale * (w_cond - w_unc)).T.reshape(-1)
    wcfg = wcfg.astype(jnp.float32)                                      # (N*N,)

    # Per-batch DDPM scalars, flat for SMEM: [sqrt_a | sqrt_s | grad_scale*w].
    coef = jnp.concatenate([sqrt_alpha, sqrt_sigma,
                            grad_scale * grad_w]).astype(jnp.float32)    # (3B,)

    kernel = functools.partial(_sds_tile_kernel, n_lat=N, batch=B)

    # v7x has 64 MiB physical VMEM (32 MiB default scoped) vs 128 MiB on
    # v5e/v6e: budget the double-buffered tiles explicitly.
    tile_bytes = tile_m * (K * 2 + N * 2 + 4)
    vmem_limit = int(min(32 * 2**20, max(2 * 2**20, 4 * tile_bytes + 2**20)))

    partials = pl.pallas_call(
        kernel,
        out_shape=jax.ShapeDtypeStruct((n_tiles, 1, tile_m), jnp.float32),
        grid_spec=pltpu.PrefetchScalarGridSpec(
            num_scalar_prefetch=0,
            grid=(B, n_m),
            in_specs=[
                pl.BlockSpec(memory_space=pltpu.MemorySpace.SMEM),      # coef
                pl.BlockSpec(memory_space=pltpu.MemorySpace.SMEM),      # wcfg
                pl.BlockSpec((N, 1), lambda b, m: (0, 0)),              # bias
                pl.BlockSpec((K, tile_m), lambda b, m: (0, b * n_m + m)),   # xT
                pl.BlockSpec((N, K), lambda b, m: (0, 0)),              # wencT
                pl.BlockSpec((N, tile_m), lambda b, m: (0, b * n_m + m)),   # epsT
            ],
            out_specs=pl.BlockSpec((1, 1, tile_m),
                                   lambda b, m: (b * n_m + m, 0, 0)),
        ),
        compiler_params=pltpu.CompilerParams(
            dimension_semantics=("parallel", "parallel"),
            vmem_limit_bytes=vmem_limit),
    )(coef, wcfg, c, xT, wencT, epsT)

    # targets = z - grad  =>  0.5 * mse_loss(z, targets, 'sum') / B
    #                      == 0.5 * sum(grad^2) / B
    return 0.5 * jnp.sum(partials) / B


def _reference_loss(x_aug, w_enc, w_unc, w_cond, eps,
                    sqrt_alpha, sqrt_sigma, grad_w,
                    *, patch, scaling_factor, guidance_scale, grad_scale):
    """Pure-JAX mirror of SDSVideoLoss.forward (f32 math; x / eps are
    pre-rounded through bf16 to match the kernel's MXU operands)."""
    B, F, C, H, W = x_aug.shape
    p = patch
    h, w = H // p, W // p
    M = F * h * w
    K = C * p * p
    xq = x_aug.astype(jnp.bfloat16).astype(jnp.float32)
    eq = eps.astype(jnp.bfloat16).astype(jnp.float32)
    # prepare_latents: (x*2-1) -> "VAE encode" (patchified linear) -> *sf
    patches = (xq.reshape(B, F, C, h, p, w, p)
                 .transpose(0, 1, 3, 5, 2, 4, 6)
                 .reshape(B, M, K))
    z = scaling_factor * ((2.0 * patches - 1.0) @ w_enc)               # (B,M,N)
    # add_noise_to_latents (DDPM scheduler.add_noise), per-batch timestep
    zt = sqrt_alpha[:, None, None] * z + sqrt_sigma[:, None, None] * eq
    # UNet stand-in (uncond / cond) + classifier-free guidance
    e_unc = zt @ w_unc
    e_cond = zt @ w_cond
    e_t = e_unc + guidance_scale * (e_cond - e_unc)
    # sds_grads: w * (eps_t - eps), nan_to_num(0,0,0), then grad_scale
    grad = grad_w[:, None, None] * (e_t - eq)
    grad = jnp.nan_to_num(grad, nan=0.0, posinf=0.0, neginf=0.0)
    grad = grad_scale * grad
    # targets = (z - grad).detach(); 0.5 * mse_loss(z, targets, 'sum') / B
    return 0.5 * jnp.sum(grad * grad) / B


if __name__ == "__main__":
    key = jax.random.PRNGKey(0)
    k_x, k_enc, k_unc, k_cond, k_t, k_eps = jax.random.split(key, 6)

    # Small video batch: (batch, frames, channels, height, width)
    B, F, C, H, W = 2, 4, 3, 32, 32
    p = 4                          # "VAE" downsample factor
    N_lat = 4                      # latent channels
    h_, w_ = H // p, W // p
    M = F * h_ * w_                # 256 latent patches per batch element

    # x_aug in [0, 1] (the [-1,1] normalization is folded into the kernel).
    x_aug = jax.random.uniform(k_x, (B, F, C, H, W), jnp.float32)

    # Deterministic synthetic parameters.
    w_enc = 0.05 * jax.random.normal(k_enc, (C * p * p, N_lat), jnp.float32)
    w_unc = 0.30 * jax.random.normal(k_unc, (N_lat, N_lat), jnp.float32)
    w_cond = 0.30 * jax.random.normal(k_cond, (N_lat, N_lat), jnp.float32)

    # DDPM scheduler quantities (alphas_cumprod) built in-script.
    T = 1000
    betas = jnp.linspace(1e-4, 0.02, T, dtype=jnp.float32)
    alphas_cumprod = jnp.cumprod(1.0 - betas)

    # timestep ~ randint(low=sds_timestep_low, high=min(950, timesteps)-1)
    timestep = jax.random.randint(k_t, (B,), 50, 949)
    alpha_t = alphas_cumprod[timestep]
    sqrt_alpha = jnp.sqrt(alpha_t).astype(jnp.float32)
    sqrt_sigma = jnp.sqrt(1.0 - alpha_t).astype(jnp.float32)
    grad_w = (1.0 - alpha_t).astype(jnp.float32)      # get_grad_weights

    # eps ~ N(0,1) in latent layout (same_noise_for_frames = False)
    eps = jax.random.normal(k_eps, (B, M, N_lat), jnp.float32)

    loss = sds_video_loss(x_aug, w_enc, w_unc, w_cond, eps,
                          sqrt_alpha, sqrt_sigma, grad_w,
                          patch=p, scaling_factor=0.18215,
                          guidance_scale=7.5, grad_scale=1.0,
                          tile_m=128)
    loss = jax.block_until_ready(loss)

    ref = _reference_loss(x_aug, w_enc, w_unc, w_cond, eps,
                          sqrt_alpha, sqrt_sigma, grad_w,
                          patch=p, scaling_factor=0.18215,
                          guidance_scale=7.5, grad_scale=1.0)
    ref = jax.block_until_ready(ref)

    assert jnp.isfinite(loss)
    assert jnp.allclose(loss, ref, rtol=2e-2, atol=1e-2), (loss, ref)
    print("KERNEL_OK")
</pallas_src>

<mosaic_0001>
module attributes {stable_mosaic.version = 11 : i64} {
  func.func @_sds_tile_kernel(%arg0: i32, %arg1: i32, %arg2: memref<6xf32, #tpu.memory_space<smem>>, %arg3: memref<16xf32, #tpu.memory_space<smem>>, %arg4: memref<4x1xf32, #tpu.memory_space<vmem>>, %arg5: memref<48x128xbf16, #tpu.memory_space<vmem>>, %arg6: memref<4x48xbf16, #tpu.memory_space<vmem>>, %arg7: memref<4x128xbf16, #tpu.memory_space<vmem>>, %arg8: memref<1x1x128xf32, #tpu.memory_space<vmem>>) attributes {dimension_semantics = [#tpu.dimension_semantics<parallel>, #tpu.dimension_semantics<parallel>], iteration_bounds = array<i64: 2, 2>, scalar_prefetch = 0 : i64, scratch_operands = 0 : i64, tpu.core_type = #tpu.core_type<tc>, window_params = [{transform_indices = @transform_0, window_bounds = array<i64: 6>}, {transform_indices = @transform_1, window_bounds = array<i64: 16>}, {pipeline_mode = #tpu.pipeline_mode<synchronous>, transform_indices = @transform_2, window_bounds = array<i64: 4, 1>}, {transform_indices = @transform_3, window_bounds = array<i64: 48, 128>}, {pipeline_mode = #tpu.pipeline_mode<synchronous>, transform_indices = @transform_4, window_bounds = array<i64: 4, 48>}, {transform_indices = @transform_5, window_bounds = array<i64: 4, 128>}, {transform_indices = @transform_6, window_bounds = array<i64: 1, 1, 128>}]} {
    %c0 = arith.constant 0 : index
    %c0_0 = arith.constant 0 : index
    %0 = vector.load %arg6[%c0, %c0_0] : memref<4x48xbf16, #tpu.memory_space<vmem>>, vector<4x48xbf16>
    %c0_1 = arith.constant 0 : index
    %c0_2 = arith.constant 0 : index
    %1 = vector.load %arg5[%c0_1, %c0_2] : memref<48x128xbf16, #tpu.memory_space<vmem>>, vector<48x128xbf16>
    %cst = arith.constant dense<0.000000e+00> : vector<4x128xf32>
    %2 = tpu.matmul %0, %1, %cst {dimension_numbers = #tpu.dot_dimension_numbers<[1], [0], [0], [1], [0, 0, 1, 1], [], []>} : vector<4x48xbf16>, vector<48x128xbf16>, vector<4x128xf32> -> vector<4x128xf32>
    %c0_3 = arith.constant 0 : index
    %c0_4 = arith.constant 0 : index
    %3 = vector.load %arg4[%c0_3, %c0_4] : memref<4x1xf32, #tpu.memory_space<vmem>>, vector<4x1xf32>
    %4 = vector.broadcast %3 : vector<4x1xf32> to vector<4x128xf32>
    %5 = arith.subf %2, %4 : vector<4x128xf32>
    %c0_5 = arith.constant 0 : index
    %c0_6 = arith.constant 0 : index
    %6 = vector.load %arg7[%c0_5, %c0_6] : memref<4x128xbf16, #tpu.memory_space<vmem>>, vector<4x128xbf16>
    %7 = arith.extf %6 : vector<4x128xbf16> to vector<4x128xf32>
    %8 = arith.index_cast %arg0 : i32 to index
    %9 = memref.load %arg2[%8] : memref<6xf32, #tpu.memory_space<smem>>
    %c2_i32 = arith.constant 2 : i32
    %10 = arith.addi %c2_i32, %arg0 : i32
    %11 = arith.index_cast %10 : i32 to index
    %12 = memref.load %arg2[%11] : memref<6xf32, #tpu.memory_space<smem>>
    %c4_i32 = arith.constant 4 : i32
    %13 = arith.addi %c4_i32, %arg0 : i32
    %14 = arith.index_cast %13 : i32 to index
    %15 = memref.load %arg2[%14] : memref<6xf32, #tpu.memory_space<smem>>
    %16 = vector.broadcast %9 : f32 to vector<4x128xf32>
    %17 = arith.mulf %16, %5 : vector<4x128xf32>
    %18 = vector.broadcast %12 : f32 to vector<4x128xf32>
    %19 = arith.mulf %18, %7 : vector<4x128xf32>
    %20 = arith.addf %17, %19 : vector<4x128xf32>
    %cst_7 = arith.constant 0.000000e+00 : f32
    %21 = vector.broadcast %cst_7 : f32 to vector<1x128xf32>
    %c0_8 = arith.constant 0 : index
    %22 = memref.load %arg3[%c0_8] : memref<16xf32, #tpu.memory_space<smem>>
    %23 = vector.extract_strided_slice %20 {offsets = [0, 0], sizes = [1, 128], strides = [1, 1]} : vector<4x128xf32> to vector<1x128xf32>
    %24 = vector.broadcast %22 : f32 to vector<1x128xf32>
    %25 = arith.mulf %24, %23 : vector<1x128xf32>
    %c1 = arith.constant 1 : index
    %26 = memref.load %arg3[%c1] : memref<16xf32, #tpu.memory_space<smem>>
    %27 = vector.extract_strided_slice %20 {offsets = [1, 0], sizes = [1, 128], strides = [1, 1]} : vector<4x128xf32> to vector<1x128xf32>
    %28 = vector.broadcast %26 : f32 to vector<1x128xf32>
    %29 = arith.mulf %28, %27 : vector<1x128xf32>
    %30 = arith.addf %25, %29 : vector<1x128xf32>
    %c2 = arith.constant 2 : index
    %31 = memref.load %arg3[%c2] : memref<16xf32, #tpu.memory_space<smem>>
    %32 = vector.extract_strided_slice %20 {offsets = [2, 0], sizes = [1, 128], strides = [1, 1]} : vector<4x128xf32> to vector<1x128xf32>
    %33 = vector.broadcast %31 : f32 to vector<1x128xf32>
    %34 = arith.mulf %33, %32 : vector<1x128xf32>
    %35 = arith.addf %30, %34 : vector<1x128xf32>
    %c3 = arith.constant 3 : index
    %36 = memref.load %arg3[%c3] : memref<16xf32, #tpu.memory_space<smem>>
    %37 = vector.extract_strided_slice %20 {offsets = [3, 0], sizes = [1, 128], strides = [1, 1]} : vector<4x128xf32> to vector<1x128xf32>
    %38 = vector.broadcast %36 : f32 to vector<1x128xf32>
    %39 = arith.mulf %38, %37 : vector<1x128xf32>
    %40 = arith.addf %35, %39 : vector<1x128xf32>
    %41 = vector.extract_strided_slice %7 {offsets = [0, 0], sizes = [1, 128], strides = [1, 1]} : vector<4x128xf32> to vector<1x128xf32>
    %42 = arith.subf %40, %41 : vector<1x128xf32>
    %43 = vector.broadcast %15 : f32 to vector<1x128xf32>
    %44 = arith.mulf %43, %42 : vector<1x128xf32>
    %cst_9 = arith.constant 0.000000e+00 : f32
    %cst_10 = arith.constant 0.000000e+00 : f32
    %cst_11 = arith.constant 0.000000e+00 : f32
    %45 = arith.cmpf one, %44, %44 : vector<1x128xf32>
    %46 = vector.broadcast %cst_9 : f32 to vector<1x128xf32>
    %47 = arith.select %45, %46, %44 : vector<1x128xi1>, vector<1x128xf32>
    %cst_12 = arith.constant 0x7F800000 : f32
    %48 = vector.broadcast %cst_12 : f32 to vector<1x128xf32>
    %49 = arith.cmpf oeq, %47, %48 : vector<1x128xf32>
    %50 = vector.broadcast %cst_11 : f32 to vector<1x128xf32>
    %51 = arith.select %49, %50, %47 : vector<1x128xi1>, vector<1x128xf32>
    %cst_13 = arith.constant 0xFF800000 : f32
    %52 = vector.broadcast %cst_13 : f32 to vector<1x128xf32>
    %53 = arith.cmpf oeq, %51, %52 : vector<1x128xf32>
    %54 = vector.broadcast %cst_10 : f32 to vector<1x128xf32>
    %55 = arith.select %53, %54, %51 : vector<1x128xi1>, vector<1x128xf32>
    %56 = arith.mulf %55, %55 : vector<1x128xf32>
    %57 = arith.addf %21, %56 : vector<1x128xf32>
    %c4 = arith.constant 4 : index
    %58 = memref.load %arg3[%c4] : memref<16xf32, #tpu.memory_space<smem>>
    %59 = vector.extract_strided_slice %20 {offsets = [0, 0], sizes = [1, 128], strides = [1, 1]} : vector<4x128xf32> to vector<1x128xf32>
    %60 = vector.broadcast %58 : f32 to vector<1x128xf32>
    %61 = arith.mulf %60, %59 : vector<1x128xf32>
    %c5 = arith.constant 5 : index
    %62 = memref.load %arg3[%c5] : memref<16xf32, #tpu.memory_space<smem>>
    %63 = vector.extract_strided_slice %20 {offsets = [1, 0], sizes = [1, 128], strides = [1, 1]} : vector<4x128xf32> to vector<1x128xf32>
    %64 = vector.broadcast %62 : f32 to vector<1x128xf32>
    %65 = arith.mulf %64, %63 : vector<1x128xf32>
    %66 = arith.addf %61, %65 : vector<1x128xf32>
    %c6 = arith.constant 6 : index
    %67 = memref.load %arg3[%c6] : memref<16xf32, #tpu.memory_space<smem>>
    %68 = vector.extract_strided_slice %20 {offsets = [2, 0], sizes = [1, 128], strides = [1, 1]} : vector<4x128xf32> to vector<1x128xf32>
    %69 = vector.broadcast %67 : f32 to vector<1x128xf32>
    %70 = arith.mulf %69, %68 : vector<1x128xf32>
    %71 = arith.addf %66, %70 : vector<1x128xf32>
    %c7 = arith.constant 7 : index
    %72 = memref.load %arg3[%c7] : memref<16xf32, #tpu.memory_space<smem>>
    %73 = vector.extract_strided_slice %20 {offsets = [3, 0], sizes = [1, 128], strides = [1, 1]} : vector<4x128xf32> to vector<1x128xf32>
    %74 = vector.broadcast %72 : f32 to vector<1x128xf32>
    %75 = arith.mulf %74, %73 : vector<1x128xf32>
    %76 = arith.addf %71, %75 : vector<1x128xf32>
    %77 = vector.extract_strided_slice %7 {offsets = [1, 0], sizes = [1, 128], strides = [1, 1]} : vector<4x128xf32> to vector<1x128xf32>
    %78 = arith.subf %76, %77 : vector<1x128xf32>
    %79 = vector.broadcast %15 : f32 to vector<1x128xf32>
    %80 = arith.mulf %79, %78 : vector<1x128xf32>
    %cst_14 = arith.constant 0.000000e+00 : f32
    %cst_15 = arith.constant 0.000000e+00 : f32
    %cst_16 = arith.constant 0.000000e+00 : f32
    %81 = arith.cmpf one, %80, %80 : vector<1x128xf32>
    %82 = vector.broadcast %cst_14 : f32 to vector<1x128xf32>
    %83 = arith.select %81, %82, %80 : vector<1x128xi1>, vector<1x128xf32>
    %cst_17 = arith.constant 0x7F800000 : f32
    %84 = vector.broadcast %cst_17 : f32 to vector<1x128xf32>
    %85 = arith.cmpf oeq, %83, %84 : vector<1x128xf32>
    %86 = vector.broadcast %cst_16 : f32 to vector<1x128xf32>
    %87 = arith.select %85, %86, %83 : vector<1x128xi1>, vector<1x128xf32>
    %cst_18 = arith.constant 0xFF800000 : f32
    %88 = vector.broadcast %cst_18 : f32 to vector<1x128xf32>
    %89 = arith.cmpf oeq, %87, %88 : vector<1x128xf32>
    %90 = vector.broadcast %cst_15 : f32 to vector<1x128xf32>
    %91 = arith.select %89, %90, %87 : vector<1x128xi1>, vector<1x128xf32>
    %92 = arith.mulf %91, %91 : vector<1x128xf32>
    %93 = arith.addf %57, %92 : vector<1x128xf32>
    %c8 = arith.constant 8 : index
    %94 = memref.load %arg3[%c8] : memref<16xf32, #tpu.memory_space<smem>>
    %95 = vector.extract_strided_slice %20 {offsets = [0, 0], sizes = [1, 128], strides = [1, 1]} : vector<4x128xf32> to vector<1x128xf32>
    %96 = vector.broadcast %94 : f32 to vector<1x128xf32>
    %97 = arith.mulf %96, %95 : vector<1x128xf32>
    %c9 = arith.constant 9 : index
    %98 = memref.load %arg3[%c9] : memref<16xf32, #tpu.memory_space<smem>>
    %99 = vector.extract_strided_slice %20 {offsets = [1, 0], sizes = [1, 128], strides = [1, 1]} : vector<4x128xf32> to vector<1x128xf32>
    %100 = vector.broadcast %98 : f32 to vector<1x128xf32>
    %101 = arith.mulf %100, %99 : vector<1x128xf32>
    %102 = arith.addf %97, %101 : vector<1x128xf32>
    %c10 = arith.constant 10 : index
    %103 = memref.load %arg3[%c10] : memref<16xf32, #tpu.memory_space<smem>>
    %104 = vector.extract_strided_slice %20 {offsets = [2, 0], sizes = [1, 128], strides = [1, 1]} : vector<4x128xf32> to vector<1x128xf32>
    %105 = vector.broadcast %103 : f32 to vector<1x128xf32>
    %106 = arith.mulf %105, %104 : vector<1x128xf32>
    %107 = arith.addf %102, %106 : vector<1x128xf32>
    %c11 = arith.constant 11 : index
    %108 = memref.load %arg3[%c11] : memref<16xf32, #tpu.memory_space<smem>>
    %109 = vector.extract_strided_slice %20 {offsets = [3, 0], sizes = [1, 128], strides = [1, 1]} : vector<4x128xf32> to vector<1x128xf32>
    %110 = vector.broadcast %108 : f32 to vector<1x128xf32>
    %111 = arith.mulf %110, %109 : vector<1x128xf32>
    %112 = arith.addf %107, %111 : vector<1x128xf32>
    %113 = vector.extract_strided_slice %7 {offsets = [2, 0], sizes = [1, 128], strides = [1, 1]} : vector<4x128xf32> to vector<1x128xf32>
    %114 = arith.subf %112, %113 : vector<1x128xf32>
    %115 = vector.broadcast %15 : f32 to vector<1x128xf32>
    %116 = arith.mulf %115, %114 : vector<1x128xf32>
    %cst_19 = arith.constant 0.000000e+00 : f32
    %cst_20 = arith.constant 0.000000e+00 : f32
    %cst_21 = arith.constant 0.000000e+00 : f32
    %117 = arith.cmpf one, %116, %116 : vector<1x128xf32>
    %118 = vector.broadcast %cst_19 : f32 to vector<1x128xf32>
    %119 = arith.select %117, %118, %116 : vector<1x128xi1>, vector<1x128xf32>
    %cst_22 = arith.constant 0x7F800000 : f32
    %120 = vector.broadcast %cst_22 : f32 to vector<1x128xf32>
    %121 = arith.cmpf oeq, %119, %120 : vector<1x128xf32>
    %122 = vector.broadcast %cst_21 : f32 to vector<1x128xf32>
    %123 = arith.select %121, %122, %119 : vector<1x128xi1>, vector<1x128xf32>
    %cst_23 = arith.constant 0xFF800000 : f32
    %124 = vector.broadcast %cst_23 : f32 to vector<1x128xf32>
    %125 = arith.cmpf oeq, %123, %124 : vector<1x128xf32>
    %126 = vector.broadcast %cst_20 : f32 to vector<1x128xf32>
    %127 = arith.select %125, %126, %123 : vector<1x128xi1>, vector<1x128xf32>
    %128 = arith.mulf %127, %127 : vector<1x128xf32>
    %129 = arith.addf %93, %128 : vector<1x128xf32>
    %c12 = arith.constant 12 : index
    %130 = memref.load %arg3[%c12] : memref<16xf32, #tpu.memory_space<smem>>
    %131 = vector.extract_strided_slice %20 {offsets = [0, 0], sizes = [1, 128], strides = [1, 1]} : vector<4x128xf32> to vector<1x128xf32>
    %132 = vector.broadcast %130 : f32 to vector<1x128xf32>
    %133 = arith.mulf %132, %131 : vector<1x128xf32>
    %c13 = arith.constant 13 : index
    %134 = memref.load %arg3[%c13] : memref<16xf32, #tpu.memory_space<smem>>
    %135 = vector.extract_strided_slice %20 {offsets = [1, 0], sizes = [1, 128], strides = [1, 1]} : vector<4x128xf32> to vector<1x128xf32>
    %136 = vector.broadcast %134 : f32 to vector<1x128xf32>
    %137 = arith.mulf %136, %135 : vector<1x128xf32>
    %138 = arith.addf %133, %137 : vector<1x128xf32>
    %c14 = arith.constant 14 : index
    %139 = memref.load %arg3[%c14] : memref<16xf32, #tpu.memory_space<smem>>
    %140 = vector.extract_strided_slice %20 {offsets = [2, 0], sizes = [1, 128], strides = [1, 1]} : vector<4x128xf32> to vector<1x128xf32>
    %141 = vector.broadcast %139 : f32 to vector<1x128xf32>
    %142 = arith.mulf %141, %140 : vector<1x128xf32>
    %143 = arith.addf %138, %142 : vector<1x128xf32>
    %c15 = arith.constant 15 : index
    %144 = memref.load %arg3[%c15] : memref<16xf32, #tpu.memory_space<smem>>
    %145 = vector.extract_strided_slice %20 {offsets = [3, 0], sizes = [1, 128], strides = [1, 1]} : vector<4x128xf32> to vector<1x128xf32>
    %146 = vector.broadcast %144 : f32 to vector<1x128xf32>
    %147 = arith.mulf %146, %145 : vector<1x128xf32>
    %148 = arith.addf %143, %147 : vector<1x128xf32>
    %149 = vector.extract_strided_slice %7 {offsets = [3, 0], sizes = [1, 128], strides = [1, 1]} : vector<4x128xf32> to vector<1x128xf32>
    %150 = arith.subf %148, %149 : vector<1x128xf32>
    %151 = vector.broadcast %15 : f32 to vector<1x128xf32>
    %152 = arith.mulf %151, %150 : vector<1x128xf32>
    %cst_24 = arith.constant 0.000000e+00 : f32
    %cst_25 = arith.constant 0.000000e+00 : f32
    %cst_26 = arith.constant 0.000000e+00 : f32
    %153 = arith.cmpf one, %152, %152 : vector<1x128xf32>
    %154 = vector.broadcast %cst_24 : f32 to vector<1x128xf32>
    %155 = arith.select %153, %154, %152 : vector<1x128xi1>, vector<1x128xf32>
    %cst_27 = arith.constant 0x7F800000 : f32
    %156 = vector.broadcast %cst_27 : f32 to vector<1x128xf32>
    %157 = arith.cmpf oeq, %155, %156 : vector<1x128xf32>
    %158 = vector.broadcast %cst_26 : f32 to vector<1x128xf32>
    %159 = arith.select %157, %158, %155 : vector<1x128xi1>, vector<1x128xf32>
    %cst_28 = arith.constant 0xFF800000 : f32
    %160 = vector.broadcast %cst_28 : f32 to vector<1x128xf32>
    %161 = arith.cmpf oeq, %159, %160 : vector<1x128xf32>
    %162 = vector.broadcast %cst_25 : f32 to vector<1x128xf32>
    %163 = arith.select %161, %162, %159 : vector<1x128xi1>, vector<1x128xf32>
    %164 = arith.mulf %163, %163 : vector<1x128xf32>
    %165 = arith.addf %129, %164 : vector<1x128xf32>
    %166 = vector.shape_cast %165 : vector<1x128xf32> to vector<1x1x128xf32>
    %c0_29 = arith.constant 0 : index
    %c0_30 = arith.constant 0 : index
    %c0_31 = arith.constant 0 : index
    %167 = vector.load %arg8[%c0_29, %c0_30, %c0_31] : memref<1x1x128xf32, #tpu.memory_space<vmem>>, vector<1x1x128xf32>
    tpu.vector_store %arg8[%c0_29, %c0_30, %c0_31], %166 {strides = array<i32>} : memref<1x1x128xf32, #tpu.memory_space<vmem>>, vector<1x1x128xf32>,
    return
  }
  func.func @transform_0(%arg0: i32, %arg1: i32) -> i32 {
    %c0_i32 = arith.constant 0 : i32
    %c0_i32_0 = arith.constant 0 : i32
    return %c0_i32 : i32
  }
  func.func @transform_1(%arg0: i32, %arg1: i32) -> i32 {
    %c0_i32 = arith.constant 0 : i32
    %c0_i32_0 = arith.constant 0 : i32
    return %c0_i32 : i32
  }
  func.func @transform_2(%arg0: i32, %arg1: i32) -> (i32, i32) {
    %c0_i32 = arith.constant 0 : i32
    %c0_i32_0 = arith.constant 0 : i32
    %c0_i32_1 = arith.constant 0 : i32
    return %c0_i32, %c0_i32_0 : i32, i32
  }
  func.func @transform_3(%arg0: i32, %arg1: i32) -> (i32, i32) {
    %c2_i32 = arith.constant 2 : i32
    %0 = arith.muli %arg0, %c2_i32 : i32
    %1 = arith.addi %0, %arg1 : i32
    %c0_i32 = arith.constant 0 : i32
    %c0_i32_0 = arith.constant 0 : i32
    return %c0_i32, %1 : i32, i32
  }
  func.func @transform_4(%arg0: i32, %arg1: i32) -> (i32, i32) {
    %c0_i32 = arith.constant 0 : i32
    %c0_i32_0 = arith.constant 0 : i32
    %c0_i32_1 = arith.constant 0 : i32
    return %c0_i32, %c0_i32_0 : i32, i32
  }
  func.func @transform_5(%arg0: i32, %arg1: i32) -> (i32, i32) {
    %c2_i32 = arith.constant 2 : i32
    %0 = arith.muli %arg0, %c2_i32 : i32
    %1 = arith.addi %0, %arg1 : i32
    %c0_i32 = arith.constant 0 : i32
    %c0_i32_0 = arith.constant 0 : i32
    return %c0_i32, %1 : i32, i32
  }
  func.func @transform_6(%arg0: i32, %arg1: i32) -> (i32, i32, i32) {
    %c2_i32 = arith.constant 2 : i32
    %0 = arith.muli %arg0, %c2_i32 : i32
    %1 = arith.addi %0, %arg1 : i32
    %c0_i32 = arith.constant 0 : i32
    %c0_i32_0 = arith.constant 0 : i32
    %c0_i32_1 = arith.constant 0 : i32
    return %1, %c0_i32, %c0_i32_0 : i32, i32, i32
  }
}

</mosaic_0001>

<llo_original>
// kernel: tpu_custom_call.1
$region0: #{tpu_custom_call.1}
  #allocation0 [shape = 'u32[]', space=smem, size = 0x4, offset = 0x4, fixed_abs, tag = 'smem constant byte address 0x4 - core index']
  #allocation1 [shape = 'u32[72,128]{1,0:T(1,128)}', space=vmem, size = 0x9000, scoped, tag = 'internal scratch']
  %s0 = inlined_call_operand.vmem [shape: f32[6], index: 0, kind: input, shape index: {}]
  %s1 = inlined_call_operand.vmem [shape: f32[16], index: 1, kind: input, shape index: {}]
  %s2 = inlined_call_operand.vmem [shape: f32[4,1], index: 2, kind: input, shape index: {}]
  %s3 = inlined_call_operand.hbm [shape: bf16[48,512], index: 3, kind: input, shape index: {}]
  %s4 = inlined_call_operand.vmem [shape: bf16[4,48], index: 4, kind: input, shape index: {}]
  %s5 = inlined_call_operand.hbm [shape: bf16[4,512], index: 5, kind: input, shape index: {}]
  %s6 = inlined_call_operand.hbm [shape: f32[4,1,128], index: 6, kind: output, shape index: {}]
  %s7 = sld [smem:[#allocation0]]
  $region73: #{tpu_custom_call.1} parent=0
    _
  %s9 = ssub.s32 1, %s7
  %s10 = scalar_select 0, %s9, %s7
  $region1: #{tpu_custom_call.1} parent=0
    #allocation2 [shape = 'u8[512]{0}', space=smem, size = 0x200, scoped, tag = 'input window, operand 0, single buffered']
    #allocation3 [shape = 's32[2]{0}', space=sflag, size = 0x8, scoped, tag = 'scoped memory for tpu_custom_call.1']
    #allocation4 [shape = 's32[2]{0}', space=sflag, size = 0x8, scoped, tag = 'scoped memory for tpu_custom_call.1']
    #allocation5 [shape = 's32[2]{0}', space=sflag, size = 0x8, scoped, tag = 'scoped memory for tpu_custom_call.1']
    #allocation6 [shape = 'u8[512]{0}', space=smem, size = 0x200, scoped, tag = 'input window, operand 1, single buffered']
    #allocation7 [shape = 's32[1]{0}', space=sflag, size = 0x4, scoped, tag = 'scoped memory for tpu_custom_call.1']
    #allocation8 [shape = 'u8[24576]{0}', space=vmem, size = 0x6000, scoped, tag = 'input window, operand 3']
    #allocation9 [shape = 'u8[2048]{0}', space=vmem, size = 0x800, scoped, tag = 'input window, operand 5']
    #allocation10 [shape = 's32[2]{0}', space=sflag, size = 0x8, scoped, tag = 'scoped memory for tpu_custom_call.1']
    #allocation11 [shape = 'u8[1024]{0}', space=vmem, size = 0x400, scoped, tag = 'output window, operand 0']
    %11 = vsyncpa [#allocation5], 0
    %12 = vsyncpa [#allocation7], 0
    %13 = vsyncpa [#allocation3], 0
    %s14 = scalar_lea.sflag [#allocation3], 1
    %15 = vsyncpa %s14, 0
    %16 = vsyncpa [#allocation10], 0
    %s17 = scalar_lea.sflag [#allocation10], 1
    %18 = vsyncpa %s17, 0
    %19 = vsyncpa [#allocation4], 0
    %s20 = scalar_lea.sflag [#allocation4], 1
    %21 = vsyncpa %s20, 0
    loop: start=0, step=1, limit=6
    $region2: #{tpu_custom_call.1} parent=1 // loop_pre_header
      _
    $region3: #{tpu_custom_call.1} parent=1 // loop_header
      %s23 = sphi 0, %s27
      %p24 = scmp.ge.s32.totalorder %s23, 6
      %s30 = sphi 0, %s42
      %s31 = sphi 0, %s38
      %s32 = sphi 0, %s30
      %s33 = sphi 0, %s31
      %s34 = sphi 0, %s32
      %s35 = sphi 0, %s33
      %s43 = sphi 0, %s43
      %s45 = sphi 0, %s43
      %s46 = sphi 0, %s45
      %s60 = sphi 0, %s46
      %s64 = sphi 0, %s64
      %s66 = sphi 0, %s64
      %s67 = sphi 0, %s66
      %s81 = sphi 0, %s67
      %s85 = sphi 0, %s85
      %s87 = sphi 0, %s85
      %s88 = sphi 0, %s87
      %s102 = sphi 0, %s88
      %s112 = sphi 0, %s114
      %s115 = sphi 0, %s112
      %s116 = sphi 0, %s115
      %s132 = sphi 0, %s116
      %s136 = sphi 0, %s136
      %s138 = sphi 0, %s136
      %s139 = sphi 0, %s138
      %s153 = sphi 0, %s139
      %s163 = sphi 0, %s165
      %s166 = sphi 0, %s163
      %s167 = sphi 0, %s166
      %s183 = sphi 0, %s167
      %s193 = sphi 0, %s195
      %s196 = sphi 0, %s193
      %s197 = sphi 0, %s196
      %s213 = sphi 0, %s197
    $region4: #{tpu_custom_call.1} parent=1 // loop_header_branch
      %26 = sbr.rel (%p24) target = $region8
    $region5: #{tpu_custom_call.1} parent=1 // loop_body
      %s28 = ssub.s32 %s23, 1
      %s29 = ssub.s32 %s23, 2
      %s36 = sadd.s32 1, %s31
      %p37 = scmp.ge.s32.totalorder %s36, 2
      %s38 = scalar_select %p37, 0, %s36
      %s39 = sadd.s32 1, %s30
      %s40 = scalar_select %p37, %s39, %s30
      %p41 = scmp.ge.s32.totalorder %s40, 2
      %s42 = scalar_select %p41, 0, %s40
      %s44 = sadd.s32 %s43, 1
      %p47 = scmp.eq.s32.totalorder %s23, 3
      %p48 = scmp.ne.s32.totalorder %s43, %s45
      %p49 = scmp.eq.s32.totalorder %s23, 0
      %p50 = por %p48, %p49
      %p51 = scmp.ne.s32.totalorder %s43, %s45
      %p52 = scmp.eq.s32.totalorder %s28, 3
      %p53 = por %p51, %p52
      %p54 = scmp.ne.s32.totalorder %s45, %s46
      %p55 = scmp.eq.s32.totalorder %s28, 0
      %p56 = por %p54, %p55
      %p57 = scmp.ne.s32.totalorder %s45, %s46
      %p58 = scmp.eq.s32.totalorder %s29, 3
      %p59 = por %p57, %p58
      %p61 = scmp.ne.s32.totalorder %s46, %s60
      %p62 = scmp.eq.s32.totalorder %s29, 0
      %p63 = por %p61, %p62
      %s65 = sadd.s32 %s64, 1
      %p68 = scmp.eq.s32.totalorder %s23, 3
      %p69 = scmp.ne.s32.totalorder %s64, %s66
      %p70 = scmp.eq.s32.totalorder %s23, 0
      %p71 = por %p69, %p70
      %p72 = scmp.ne.s32.totalorder %s64, %s66
      %p73 = scmp.eq.s32.totalorder %s28, 3
      %p74 = por %p72, %p73
      %p75 = scmp.ne.s32.totalorder %s66, %s67
      %p76 = scmp.eq.s32.totalorder %s28, 0
      %p77 = por %p75, %p76
      %p78 = scmp.ne.s32.totalorder %s66, %s67
      %p79 = scmp.eq.s32.totalorder %s29, 3
      %p80 = por %p78, %p79
      %p82 = scmp.ne.s32.totalorder %s67, %s81
      %p83 = scmp.eq.s32.totalorder %s29, 0
      %p84 = por %p82, %p83
      %s86 = sadd.s32 %s85, 1
      %p89 = scmp.eq.s32.totalorder %s23, 3
      %p90 = scmp.ne.s32.totalorder %s85, %s87
      %p91 = scmp.eq.s32.totalorder %s23, 0
      %p92 = por %p90, %p91
      %p93 = scmp.ne.s32.totalorder %s85, %s87
      %p94 = scmp.eq.s32.totalorder %s28, 3
      %p95 = por %p93, %p94
      %p96 = scmp.ne.s32.totalorder %s87, %s88
      %p97 = scmp.eq.s32.totalorder %s28, 0
      %p98 = por %p96, %p97
      %p99 = scmp.ne.s32.totalorder %s87, %s88
      %p100 = scmp.eq.s32.totalorder %s29, 3
      %p101 = por %p99, %p100
      %p103 = scmp.ne.s32.totalorder %s88, %s102
      %p104 = scmp.eq.s32.totalorder %s29, 0
      %p105 = por %p103, %p104
      %s106 = smul.u32 %s30, 2
      %s107 = sadd.s32 %s106, %s31
      %s108 = smul.u32 %s42, 2
      %s109 = sadd.s32 %s108, %s38
      %s110 = ssub.s32 %s107, %s109
      %p111 = scmp.eq.s32.totalorder %s110, 0
      %s113 = sadd.s32 %s112, 1
      %s114 = scalar_select %p111, %s112, %s113
      %p117 = pneg %p111
      %p118 = scmp.eq.s32.totalorder %s23, 3
      %p119 = por %p117, %p118
      %p120 = scmp.ne.s32.totalorder %s112, %s115
      %p121 = scmp.eq.s32.totalorder %s23, 0
      %p122 = por %p120, %p121
      %p123 = scmp.ne.s32.totalorder %s112, %s115
      %p124 = scmp.eq.s32.totalorder %s28, 3
      %p125 = por %p123, %p124
      %p126 = scmp.ne.s32.totalorder %s115, %s116
      %p127 = scmp.eq.s32.totalorder %s28, 0
      %p128 = por %p126, %p127
      %p129 = scmp.ne.s32.totalorder %s115, %s116
      %p130 = scmp.eq.s32.totalorder %s29, 3
      %p131 = por %p129, %p130
      %p133 = scmp.ne.s32.totalorder %s116, %s132
      %p134 = scmp.eq.s32.totalorder %s29, 0
      %p135 = por %p133, %p134
      %s137 = sadd.s32 %s136, 1
      %p140 = scmp.eq.s32.totalorder %s23, 3
      %p141 = scmp.ne.s32.totalorder %s136, %s138
      %p142 = scmp.eq.s32.totalorder %s23, 0
      %p143 = por %p141, %p142
      %p144 = scmp.ne.s32.totalorder %s136, %s138
      %p145 = scmp.eq.s32.totalorder %s28, 3
      %p146 = por %p144, %p145
      %p147 = scmp.ne.s32.totalorder %s138, %s139
      %p148 = scmp.eq.s32.totalorder %s28, 0
      %p149 = por %p147, %p148
      %p150 = scmp.ne.s32.totalorder %s138, %s139
      %p151 = scmp.eq.s32.totalorder %s29, 3
      %p152 = por %p150, %p151
      %p154 = scmp.ne.s32.totalorder %s139, %s153
      %p155 = scmp.eq.s32.totalorder %s29, 0
      %p156 = por %p154, %p155
      %s157 = smul.u32 %s30, 2
      %s158 = sadd.s32 %s157, %s31
      %s159 = smul.u32 %s42, 2
      %s160 = sadd.s32 %s159, %s38
      %s161 = ssub.s32 %s158, %s160
      %p162 = scmp.eq.s32.totalorder %s161, 0
      %s164 = sadd.s32 %s163, 1
      %s165 = scalar_select %p162, %s163, %s164
      %p168 = pneg %p162
      %p169 = scmp.eq.s32.totalorder %s23, 3
      %p170 = por %p168, %p169
      %p171 = scmp.ne.s32.totalorder %s163, %s166
      %p172 = scmp.eq.s32.totalorder %s23, 0
      %p173 = por %p171, %p172
      %p174 = scmp.ne.s32.totalorder %s163, %s166
      %p175 = scmp.eq.s32.totalorder %s28, 3
      %p176 = por %p174, %p175
      %p177 = scmp.ne.s32.totalorder %s166, %s167
      %p178 = scmp.eq.s32.totalorder %s28, 0
      %p179 = por %p177, %p178
      %p180 = scmp.ne.s32.totalorder %s166, %s167
      %p181 = scmp.eq.s32.totalorder %s29, 3
      %p182 = por %p180, %p181
      %p184 = scmp.ne.s32.totalorder %s167, %s183
      %p185 = scmp.eq.s32.totalorder %s29, 0
      %p186 = por %p184, %p185
      %s187 = smul.u32 %s30, 2
      %s188 = sadd.s32 %s187, %s31
      %s189 = smul.u32 %s42, 2
      %s190 = sadd.s32 %s189, %s38
      %s191 = ssub.s32 %s188, %s190
      %p192 = scmp.eq.s32.totalorder %s191, 0
      %s194 = sadd.s32 %s193, 1
      %s195 = scalar_select %p192, %s193, %s194
      %p198 = pneg %p192
      %p199 = scmp.eq.s32.totalorder %s23, 3
      %p200 = por %p198, %p199
      %p201 = scmp.ne.s32.totalorder %s193, %s196
      %p202 = scmp.eq.s32.totalorder %s23, 0
      %p203 = por %p201, %p202
      %p204 = scmp.ne.s32.totalorder %s193, %s196
      %p205 = scmp.eq.s32.totalorder %s28, 3
      %p206 = por %p204, %p205
      %p207 = scmp.ne.s32.totalorder %s196, %s197
      %p208 = scmp.eq.s32.totalorder %s28, 0
      %p209 = por %p207, %p208
      %p210 = scmp.ne.s32.totalorder %s196, %s197
      %p211 = scmp.eq.s32.totalorder %s29, 3
      %p212 = por %p210, %p211
      %p214 = scmp.ne.s32.totalorder %s197, %s213
      %p215 = scmp.eq.s32.totalorder %s29, 0
      %p216 = por %p214, %p215
      %p217 = scmp.le.s32.totalorder 1, %s23
      %p218 = scmp.lt.s32.totalorder %s23, 5
      %p219 = pnand %p217, %p218
      %p220 = pneg %p219
      // Predicated region
      $region9: #{tpu_custom_call.1} parent=5 // pred_check
        _
      $region10: #{tpu_custom_call.1} parent=5 // pred_check_branch
        %222 = sbr.rel (%p219) target = $region12
      $region11: #{tpu_custom_call.1} parent=5 // pred_region
        %s223 = ssub.s32 %s23, 1
        // Predicated region
        $region13: #{tpu_custom_call.1} parent=11 // pred_check
          %p224 = pneg %p56
        $region14: #{tpu_custom_call.1} parent=11 // pred_check_branch
          %226 = sbr.rel (%p224) target = $region16
        $region15: #{tpu_custom_call.1} parent=11 // pred_region
          %228 = vsyncadd [#allocation5], 0
          %s230 = sshll.u32 %s0, 4
          %s231 = int_to_ptr.vmem [resolvable:$true] %s230
          %233 = dma.vmem_to_smem %s231, 16, [#allocation2], [#allocation5]
        $region16: #{tpu_custom_call.1} parent=11 // pred_fallthru
          _
        // Predicated region
        $region17: #{tpu_custom_call.1} parent=11 // pred_check
          %p234 = pneg %p77
        $region18: #{tpu_custom_call.1} parent=11 // pred_check_branch
          %236 = sbr.rel (%p234) target = $region20
        $region19: #{tpu_custom_call.1} parent=11 // pred_region
          %238 = vsyncadd [#allocation7], 0
          %s240 = sshll.u32 %s1, 4
          %s241 = int_to_ptr.vmem [resolvable:$true] %s240
          %243 = dma.vmem_to_smem %s241, 16, [#allocation6], [#allocation7]
        $region20: #{tpu_custom_call.1} parent=11 // pred_fallthru
          _
        // Predicated region
        $region21: #{tpu_custom_call.1} parent=11 // pred_check
          %p244 = pneg %p98
        $region22: #{tpu_custom_call.1} parent=11 // pred_check_branch
          %246 = sbr.rel (%p244) target = $region24
        $region23: #{tpu_custom_call.1} parent=11 // pred_region
          _
        $region24: #{tpu_custom_call.1} parent=11 // pred_fallthru
          _
        // Predicated region
        $region25: #{tpu_custom_call.1} parent=11 // pred_check
          %p247 = pneg %p149
        $region26: #{tpu_custom_call.1} parent=11 // pred_check_branch
          %249 = sbr.rel (%p247) target = $region28
        $region27: #{tpu_custom_call.1} parent=11 // pred_region
          _
        $region28: #{tpu_custom_call.1} parent=11 // pred_fallthru
          _
      $region12: #{tpu_custom_call.1} parent=5 // pred_fallthru
        _
      %p250 = scmp.lt.s32.totalorder %s23, 4
      // Predicated region
      $region29: #{tpu_custom_call.1} parent=5 // pred_check
        %p251 = pneg %p250
      $region30: #{tpu_custom_call.1} parent=5 // pred_check_branch
        %253 = sbr.rel (%p251) target = $region32
      $region31: #{tpu_custom_call.1} parent=5 // pred_region
        // Predicated region
        $region33: #{tpu_custom_call.1} parent=31 // pred_check
          %p254 = pneg %p122
        $region34: #{tpu_custom_call.1} parent=31 // pred_check_branch
          %256 = sbr.rel (%p254) target = $region36
        $region35: #{tpu_custom_call.1} parent=31 // pred_region
          %s257 = sand.u32 %s112, 1
          %s258 = scalar_lea.sflag [#allocation3], %s257
          %s259 = sand.u32 %s112, 1
          %s260 = smul.addr %s259, 24
          %s261 = scalar_lea.vmem [#allocation8], %s260
          %s262 = smul.u32 %s30, 2
          %s263 = sadd.s32 %s262, %s31
          %265 = vsyncadd %s258, 0
          %s266 = smul.addr %s263, 4
          %s267 = scalar_lea.hbm %s3, %s266
          %s268 = sshll.u32 %s267, 4
          %s269 = int_to_ptr.hbm [resolvable:$true] %s268
          %s270 = sshll.u32 %s261, 4
          %s271 = int_to_ptr.vmem [resolvable:$true] %s270
          %276 = dma.hbm_to_vmem [thread:$0]  %s269, 384, %s271, %s258, 256, 64, 4
        $region36: #{tpu_custom_call.1} parent=31 // pred_fallthru
          _
        // Predicated region
        $region37: #{tpu_custom_call.1} parent=31 // pred_check
          %p277 = pneg %p173
        $region38: #{tpu_custom_call.1} parent=31 // pred_check_branch
          %279 = sbr.rel (%p277) target = $region40
        $region39: #{tpu_custom_call.1} parent=31 // pred_region
          %s280 = sand.u32 %s163, 1
          %s281 = scalar_lea.sflag [#allocation10], %s280
          %s282 = sand.u32 %s163, 1
          %s283 = smul.addr %s282, 2
          %s284 = scalar_lea.vmem [#allocation9], %s283
          %s285 = smul.u32 %s30, 2
          %s286 = sadd.s32 %s285, %s31
          %288 = vsyncadd %s281, 0
          %s289 = smul.addr %s286, 2
          %s290 = scalar_lea.hbm %s5, %s289
          %s292 = sshll.u32 %s290, 4
          %s293 = int_to_ptr.hbm [resolvable:$true] %s292
          %s294 = sshll.u32 %s284, 4
          %s295 = int_to_ptr.vmem [resolvable:$true] %s294
          %297 = dma.hbm_to_vmem [thread:$0]  %s293, 32, %s295, %s281
        $region40: #{tpu_custom_call.1} parent=31 // pred_fallthru
          _
      $region32: #{tpu_custom_call.1} parent=5 // pred_fallthru
        _
      %p298 = scmp.le.s32.totalorder 1, %s23
      %p299 = scmp.lt.s32.totalorder %s23, 5
      %p300 = pnand %p298, %p299
      %p301 = pneg %p300
      // Predicated region
      $region41: #{tpu_custom_call.1} parent=5 // pred_check
        _
      $region42: #{tpu_custom_call.1} parent=5 // pred_check_branch
        %303 = sbr.rel (%p300) target = $region44
      $region43: #{tpu_custom_call.1} parent=5 // pred_region
        %s304 = ssub.s32 %s23, 1
        // Predicated region
        $region45: #{tpu_custom_call.1} parent=43 // pred_check
          %p305 = pneg %p56
        $region46: #{tpu_custom_call.1} parent=43 // pred_check_branch
          %307 = sbr.rel (%p305) target = $region48
        $region47: #{tpu_custom_call.1} parent=43 // pred_region
          %309 = dma.done [#allocation5], 16
        $region48: #{tpu_custom_call.1} parent=43 // pred_fallthru
          _
        // Predicated region
        $region49: #{tpu_custom_call.1} parent=43 // pred_check
          %p310 = pneg %p77
        $region50: #{tpu_custom_call.1} parent=43 // pred_check_branch
          %312 = sbr.rel (%p310) target = $region52
        $region51: #{tpu_custom_call.1} parent=43 // pred_region
          %314 = dma.done [#allocation7], 16
        $region52: #{tpu_custom_call.1} parent=43 // pred_fallthru
          _
        %s315 = sand.u32 %s115, 1
        %s316 = scalar_lea.sflag [#allocation3], %s315
        %s317 = sand.u32 %s115, 1
        %s318 = smul.addr %s317, 24
        %s319 = scalar_lea.vmem [#allocation8], %s318
        // Predicated region
        $region53: #{tpu_custom_call.1} parent=43 // pred_check
          %p320 = pneg %p128
        $region54: #{tpu_custom_call.1} parent=43 // pred_check_branch
          %322 = sbr.rel (%p320) target = $region56
        $region55: #{tpu_custom_call.1} parent=43 // pred_region
          %324 = dma.done %s316, 384
        $region56: #{tpu_custom_call.1} parent=43 // pred_fallthru
          _
        %s325 = sand.u32 %s166, 1
        %s326 = scalar_lea.sflag [#allocation10], %s325
        %s327 = sand.u32 %s166, 1
        %s328 = smul.addr %s327, 2
        %s329 = scalar_lea.vmem [#allocation9], %s328
        // Predicated region
        $region57: #{tpu_custom_call.1} parent=43 // pred_check
          %p330 = pneg %p179
        $region58: #{tpu_custom_call.1} parent=43 // pred_check_branch
          %332 = sbr.rel (%p330) target = $region60
        $region59: #{tpu_custom_call.1} parent=43 // pred_region
          %334 = dma.done %s326, 32
        $region60: #{tpu_custom_call.1} parent=43 // pred_fallthru
          _
        %335 = sfence
        %p336 = pneg %p56
        %p337 = pneg %p53
        %p338 = pneg %p77
        %p339 = pneg %p74
        %p340 = pneg %p98
        %p341 = pneg %p95
        %s342 = sand.u32 %s115, 1
        %s343 = scalar_lea.sflag [#allocation3], %s342
        %s344 = sand.u32 %s115, 1
        %s345 = smul.addr %s344, 24
        %s346 = scalar_lea.vmem [#allocation8], %s345
        %p347 = pneg %p128
        %p348 = pneg %p125
        %p349 = pneg %p149
        %p350 = pneg %p146
        %s351 = sand.u32 %s166, 1
        %s352 = scalar_lea.sflag [#allocation10], %s351
        %s353 = sand.u32 %s166, 1
        %s354 = smul.addr %s353, 2
        %s355 = scalar_lea.vmem [#allocation9], %s354
        %p356 = pneg %p179
        %p357 = pneg %p176
        %p358 = pneg %p209
        %p359 = pneg %p206
        %s360 = sand.u32 %s196, 1
        %s361 = scalar_lea.sflag [#allocation4], %s360
        %s362 = sand.u32 %s196, 1
        %s363 = scalar_lea.vmem [#allocation11], %s362
        %s364 = smul.u32 %s32, 2
        %s365 = sadd.s32 %s364, %s33
        %s366 = smul.u32 %s32, 2
        %s367 = sadd.s32 %s366, %s33
        %s368 = smul.u32 %s32, 2
        %s369 = sadd.s32 %s368, %s33
        %v371 = vld [vmem:[%s4] sm:$0x3]
        %v372 = vld [vmem:[%s319] sm:$0xf]
        %v373 = vld [vmem:[%s319 + $0x4] sm:$0xf]
        %v374 = vld [vmem:[%s319 + $0x8] sm:$0xf]
        %v375 = vld [vmem:[%s319 + $0xc] sm:$0xf]
        %v376 = vld [vmem:[%s319 + $0x10] sm:$0xf]
        %v377 = vld [vmem:[%s319 + $0x14] sm:$0xf]
        %v384 = vunpack.c.l.b16 %v372
        %v385 = vunpack.c.l.b16 %v373
        %v386 = vunpack.c.l.b16 %v374
        %v387 = vunpack.c.l.b16 %v375
        %v388 = vunpack.c.l.b16 %v376
        %v389 = vunpack.c.l.b16 %v377
        %v390 = vpack.c.b16 %v385, %v384
        %v391 = vpack.c.b16 %v387, %v386
        %v392 = vpack.c.b16 %v389, %v388
        %vm396 = vcmask 392192
        %v398 = vsel %vm396, %v371, 0
        %400 = vmatpush.bf16.msra.mxu0 0
        %401 = vmatpush.bf16.msra.mxu0 0
        %402 = vmatpush.bf16.msra.mxu0 0
        %403 = vmatpush.bf16.msra.mxu0 0
        %404 = vmatpush.bf16.msra.mxu0 0
        %405 = vmatpush.bf16.msra.mxu0 %v392
        %406 = vmatpush.bf16.msra.mxu0 %v391
        %407 = vmatpush.bf16.msra.mxu0 %v390
        %408 = vmatmul.bf16.gmra.mxu0 %v398
        %v409 = vpop.f32.mrf.mxu0
        %v410 = vadd.f32 0.0, %v409
        %v411 = vpop.f32.mrf.mxu0
        %412 = vdwg.mxu0
        %v413 = vld [vmem:[%s2] sm:$0xf]
        %415 = vset.pattern.permute.xlu0 0
        %416 = vperm.xlu0 %415, %v413
        %v417 = vpop.permute.xlu0 %416
        %v419 = vsub.f32 %v410, %v417
        %v420 = vld [vmem:[%s329] sm:$0x3]
        %v421 = vunpack.c.l.bf16 %v420
        %s422 = sld [smem:[#allocation2 + %s32]]
        %s423 = sadd.s32 %s32, 2
        %s424 = sld [smem:[#allocation2 + %s423]]
        %s425 = sadd.s32 %s32, 4
        %s426 = sld [smem:[#allocation2 + %s425]]
        %v427 = vstv %s422
        %v428 = vmul.f32 %v427, %v419
        %v429 = vstv %s424
        %v430 = vmul.f32 %v429, %v421
        %v431 = vadd.f32 %v428, %v430
        %s432 = sld [smem:[#allocation6]]
        %v433 = vstv %s432
        %v434 = vmul.f32 %v433, %v431
        %s435 = sld [smem:[#allocation6 + $0x1]]
        %v436 = vstv %s435
        %v437 = vmul.f32 %v436, %v431
        %v439 = vrot.slane %v437, 1
        %v441 = vadd.f32 %v434, %v439
        %s442 = sld [smem:[#allocation6 + $0x2]]
        %v443 = vstv %s442
        %v444 = vmul.f32 %v443, %v431
        %v446 = vrot.slane %v444, 2
        %v448 = vadd.f32 %v441, %v446
        %s449 = sld [smem:[#allocation6 + $0x3]]
        %v450 = vstv %s449
        %v451 = vmul.f32 %v450, %v431
        %v453 = vrot.slane %v451, 3
        %v455 = vadd.f32 %v448, %v453
        %v456 = vsub.f32 %v455, %v421
        %v457 = vstv %s426
        %v458 = vmul.f32 %v457, %v456
        %vm459 = vcmp.ne.f32.partialorder %v458, %v458
        %v460 = vsel %vm459, 0.0, %v458
        %vm461 = vcmp.eq.f32.partialorder %v460, inf
        %v462 = vsel %vm461, 0.0, %v460
        %vm463 = vcmp.eq.f32.partialorder %v462, -inf
        %v464 = vsel %vm463, 0.0, %v462
        %v465 = vmul.f32 %v464, %v464
        %v466 = vadd.f32 %v465, 0.0
        %s467 = sld [smem:[#allocation6 + $0x4]]
        %v468 = vstv %s467
        %v469 = vmul.f32 %v468, %v431
        %s470 = sld [smem:[#allocation6 + $0x5]]
        %v471 = vstv %s470
        %v472 = vmul.f32 %v471, %v431
        %v474 = vrot.slane %v472, 1
        %v476 = vadd.f32 %v469, %v474
        %s477 = sld [smem:[#allocation6 + $0x6]]
        %v478 = vstv %s477
        %v479 = vmul.f32 %v478, %v431
        %v481 = vrot.slane %v479, 2
        %v483 = vadd.f32 %v476, %v481
        %s484 = sld [smem:[#allocation6 + $0x7]]
        %v485 = vstv %s484
        %v486 = vmul.f32 %v485, %v431
        %v488 = vrot.slane %v486, 3
        %v490 = vadd.f32 %v483, %v488
        %v492 = vperm.slane %v421, 1
        %v494 = vsub.f32 %v490, %v492
        %v495 = vmul.f32 %v457, %v494
        %vm496 = vcmp.ne.f32.partialorder %v495, %v495
        %v497 = vsel %vm496, 0.0, %v495
        %vm498 = vcmp.eq.f32.partialorder %v497, inf
        %v499 = vsel %vm498, 0.0, %v497
        %vm500 = vcmp.eq.f32.partialorder %v499, -inf
        %v501 = vsel %vm500, 0.0, %v499
        %v502 = vmul.f32 %v501, %v501
        %v503 = vadd.f32 %v466, %v502
        %s504 = sld [smem:[#allocation6 + $0x8]]
        %v505 = vstv %s504
        %v506 = vmul.f32 %v505, %v431
        %s507 = sld [smem:[#allocation6 + $0x9]]
        %v508 = vstv %s507
        %v509 = vmul.f32 %v508, %v431
        %v511 = vrot.slane %v509, 1
        %v513 = vadd.f32 %v506, %v511
        %s514 = sld [smem:[#allocation6 + $0xa]]
        %v515 = vstv %s514
        %v516 = vmul.f32 %v515, %v431
        %v518 = vrot.slane %v516, 2
        %v520 = vadd.f32 %v513, %v518
        %s521 = sld [smem:[#allocation6 + $0xb]]
        %v522 = vstv %s521
        %v523 = vmul.f32 %v522, %v431
        %v525 = vrot.slane %v523, 3
        %v527 = vadd.f32 %v520, %v525
        %v528 = vperm.slane %v421, 2
        %v530 = vsub.f32 %v527, %v528
        %v531 = vmul.f32 %v457, %v530
        %vm532 = vcmp.ne.f32.partialorder %v531, %v531
        %v533 = vsel %vm532, 0.0, %v531
        %vm534 = vcmp.eq.f32.partialorder %v533, inf
        %v535 = vsel %vm534, 0.0, %v533
        %vm536 = vcmp.eq.f32.partialorder %v535, -inf
        %v537 = vsel %vm536, 0.0, %v535
        %v538 = vmul.f32 %v537, %v537
        %v539 = vadd.f32 %v503, %v538
        %s540 = sld [smem:[#allocation6 + $0xc]]
        %v541 = vstv %s540
        %v542 = vmul.f32 %v541, %v431
        %s543 = sld [smem:[#allocation6 + $0xd]]
        %v544 = vstv %s543
        %v545 = vmul.f32 %v544, %v431
        %v547 = vrot.slane %v545, 1
        %v549 = vadd.f32 %v542, %v547
        %s550 = sld [smem:[#allocation6 + $0xe]]
        %v551 = vstv %s550
        %v552 = vmul.f32 %v551, %v431
        %v554 = vrot.slane %v552, 2
        %v556 = vadd.f32 %v549, %v554
        %s557 = sld [smem:[#allocation6 + $0xf]]
        %v558 = vstv %s557
        %v559 = vmul.f32 %v558, %v431
        %v561 = vrot.slane %v559, 3
        %v563 = vadd.f32 %v556, %v561
        %v564 = vperm.slane %v421, 3
        %v566 = vsub.f32 %v563, %v564
        %v567 = vmul.f32 %v457, %v566
        %vm568 = vcmp.ne.f32.partialorder %v567, %v567
        %v569 = vsel %vm568, 0.0, %v567
        %vm570 = vcmp.eq.f32.partialorder %v569, inf
        %v571 = vsel %vm570, 0.0, %v569
        %vm572 = vcmp.eq.f32.partialorder %v571, -inf
        %v573 = vsel %vm572, 0.0, %v571
        %v574 = vmul.f32 %v573, %v573
        %v575 = vadd.f32 %v539, %v574
        %576 = vst [vmem:[%s363] sm:$0x1] %v575
        %s577 = sand.u32 %s196, 1
        %s578 = scalar_lea.sflag [#allocation4], %s577
        %s579 = sand.u32 %s196, 1
        %s580 = scalar_lea.vmem [#allocation11], %s579
        // Predicated region
        $region61: #{tpu_custom_call.1} parent=43 // pred_check
          %p581 = pneg %p206
        $region62: #{tpu_custom_call.1} parent=43 // pred_check_branch
          %583 = sbr.rel (%p581) target = $region64
        $region63: #{tpu_custom_call.1} parent=43 // pred_region
          %s584 = smul.u32 %s32, 2
          %s585 = sadd.s32 %s584, %s33
          %587 = vsyncadd %s578, 0
          %s588 = scalar_lea.hbm %s6, %s585
          %s590 = sshll.u32 %s580, 4
          %s591 = int_to_ptr.vmem [resolvable:$true] %s590
          %s592 = sshll.u32 %s588, 4
          %s593 = int_to_ptr.hbm [resolvable:$true] %s592
          %595 = dma.vmem_to_hbm [thread:$0]  %s591, 16, %s593, %s578
        $region64: #{tpu_custom_call.1} parent=43 // pred_fallthru
          _
      $region44: #{tpu_custom_call.1} parent=5 // pred_fallthru
        _
      %p596 = scmp.le.s32.totalorder 2, %s23
      // Predicated region
      $region65: #{tpu_custom_call.1} parent=5 // pred_check
        %p597 = pneg %p596
      $region66: #{tpu_custom_call.1} parent=5 // pred_check_branch
        %599 = sbr.rel (%p597) target = $region68
      $region67: #{tpu_custom_call.1} parent=5 // pred_region
        %s600 = ssub.s32 %s23, 2
        // Predicated region
        $region69: #{tpu_custom_call.1} parent=67 // pred_check
          %p601 = pneg %p212
        $region70: #{tpu_custom_call.1} parent=67 // pred_check_branch
          %603 = sbr.rel (%p601) target = $region72
        $region71: #{tpu_custom_call.1} parent=67 // pred_region
          %s604 = sand.u32 %s197, 1
          %s605 = scalar_lea.sflag [#allocation4], %s604
          %s606 = sand.u32 %s197, 1
          %s607 = scalar_lea.vmem [#allocation11], %s606
          %609 = dma.done %s605, 16
        $region72: #{tpu_custom_call.1} parent=67 // pred_fallthru
          _
      $region68: #{tpu_custom_call.1} parent=5 // pred_fallthru
        _
    $region6: #{tpu_custom_call.1} parent=1 // loop_footer
      %s27 = sadd.s32 1, %s23
    $region7: #{tpu_custom_call.1} parent=1 // loop_footer_branch
      %22 = sbr.rel target = $region3
    $region8: #{tpu_custom_call.1} parent=1 // loop_exit
      _
    %610 = vsyncpa [#allocation3], 1
    %s611 = scalar_lea.sflag [#allocation3], 1
    %612 = vsyncpa %s611, 1
    %613 = vsyncpa [#allocation10], 1
    %s614 = scalar_lea.sflag [#allocation10], 1
    %615 = vsyncpa %s614, 1
    %616 = vsyncpa [#allocation4], 1
    %s617 = scalar_lea.sflag [#allocation4], 1
    %618 = vsyncpa %s617, 1
    %619 = vsyncpa [#allocation5], 1
    %s620 = scalar_lea.sflag [#allocation5], 1
    %621 = vsyncpa %s620, 1
    %622 = vsyncpa [#allocation7], 1

</llo_original>
